<compile_context>
chip_gen: v7x
topology: tpu7x:2x2x1
jax: 0.10.0
libtpu: 0.0.40
codegen_flags: <defaults>
</compile_context>

<pallas_src>
import functools

import jax
import jax.numpy as jnp
from jax import lax
from jax.experimental import pallas as pl
from jax.experimental.pallas import tpu as pltpu

# Older JAX releases call this TPUCompilerParams; prefer the current name.
_CompilerParams = getattr(pltpu, "CompilerParams",
                          getattr(pltpu, "TPUCompilerParams", None))


def _sigmoid(v):
    # exp lowers to the EUP; the divide is on a tiny (Bblk, C)-sized tensor, so an
    # exact divide keeps the gate accurate (approx vrcp not needed here).
    return 1.0 / (1.0 + jnp.exp(-v))


def _se_kernel(x_ref, w1_ref, w2_ref, o_ref, *, inv_hw):
    """Fused SEBlock forward for one batch block.

    x_ref / o_ref : (Bblk, C, HW)  native NCHW layout, storage dtype
    w1_ref        : (Cr, C)        first nn.Linear weight (no bias)
    w2_ref        : (C, Cr)        second nn.Linear weight (no bias)
    """
    # ---- squeeze: global average pool over H*W (lane-axis reduction) ----------
    xs = x_ref[...].astype(jnp.float32)                    # f32 math in-kernel
    s = jnp.sum(xs, axis=2) * inv_hw                       # (Bblk, C)

    # ---- excitation: Linear -> SiLU -> Linear -> Sigmoid (f32 accumulation) ---
    w1 = w1_ref[...].astype(jnp.float32)                   # (Cr, C)
    w2 = w2_ref[...].astype(jnp.float32)                   # (C, Cr)
    # s @ w1.T (contract over C) — matches torch.nn.Linear(C, Cr, bias=False)
    e = lax.dot_general(s, w1, (((1,), (1,)), ((), ())),
                        preferred_element_type=jnp.float32)          # (Bblk, Cr)
    e = e * _sigmoid(e)                                              # SiLU
    g = lax.dot_general(e, w2, (((1,), (1,)), ((), ())),
                        preferred_element_type=jnp.float32)          # (Bblk, C)
    gate = _sigmoid(g)                                               # (Bblk, C)

    # ---- scale: re-read x_ref (cheap vld) so the big block isn't held live ----
    o_ref[...] = (x_ref[...].astype(jnp.float32)
                  * gate[:, :, None]).astype(o_ref.dtype)


def se_block_forward(x_nchw, w1, w2):
    """SEBlock forward.

    x_nchw : (N, C, H, W)        input (PyTorch NCHW layout, any float dtype)
    w1     : (C // ratio, C)     first nn.Linear weight (no bias)
    w2     : (C, C // ratio)     second nn.Linear weight (no bias)
    """
    N, C, H, W = x_nchw.shape
    Cr = w1.shape[0]
    HW = H * W

    # Free (contiguous) reshape: keep the native NCHW layout end-to-end.
    x_flat = x_nchw.reshape(N, C, HW)
    itemsize = jnp.dtype(x_flat.dtype).itemsize

    # ---- generation-aware VMEM budget -----------------------------------------
    try:
        vmem_capacity = int(pltpu.get_tpu_info().vmem_capacity_bytes)
    except Exception:
        vmem_capacity = 64 * 1024 * 1024            # v7x-safe fallback
    vmem_limit = int(min(vmem_capacity - (8 << 20), 112 << 20))

    # Weights are tiny and resident (constant index_map) but still get the default
    # 2 buffers; account for them explicitly.
    # TODO(synk): use pipeline_mode=pl.Buffered(1) on the weight specs once
    # single-buffered resident operands are universally supported.
    weight_bytes = 2 * 2 * C * Cr * jnp.dtype(w1.dtype).itemsize

    # (x block + out block) * 2 buffers, in the storage dtype, per image.
    per_img_bytes = 4 * C * HW * itemsize
    block_budget = max(per_img_bytes, vmem_limit - weight_bytes - (4 << 20))
    cap = max(1, block_budget // per_img_bytes)
    if N >= 2:
        # Keep the grid >= 2 so DMA/compute double-buffering exists and v7x's two
        # TensorCores both get work on the "parallel" batch axis.
        cap = min(cap, max(1, N // 2))
    batch_block = int(max(1, min(cap, N)))
    grid = (pl.cdiv(N, batch_block),)               # ragged last block is masked

    # TODO(synk): for very large H*W (early-stage SE layers) a two-pass spatially
    # tiled reduce-then-scale variant is needed; whole-image blocks are fine here.

    grid_spec = pltpu.PrefetchScalarGridSpec(
        num_scalar_prefetch=0,
        grid=grid,
        in_specs=[
            pl.BlockSpec((batch_block, C, HW), lambda n: (n, 0, 0)),
            pl.BlockSpec((Cr, C), lambda n: (0, 0)),
            pl.BlockSpec((C, Cr), lambda n: (0, 0)),
        ],
        out_specs=pl.BlockSpec((batch_block, C, HW), lambda n: (n, 0, 0)),
    )

    out_flat = pl.pallas_call(
        functools.partial(_se_kernel, inv_hw=1.0 / float(HW)),
        out_shape=jax.ShapeDtypeStruct((N, C, HW), x_flat.dtype),
        grid_spec=grid_spec,
        compiler_params=_CompilerParams(
            dimension_semantics=("parallel",),      # independent images -> megacore
            vmem_limit_bytes=vmem_limit,
        ),
    )(x_flat, w1, w2)

    return out_flat.reshape(N, C, H, W)


def se_block_reference(x, w1, w2):
    """Pure-JAX reference mirroring the PyTorch SEBlock.forward."""
    xf = x.astype(jnp.float32)
    s = jnp.mean(xf, axis=(2, 3))                            # AdaptiveAvgPool2d(1)
    e = s @ w1.astype(jnp.float32).T
    e = e * (1.0 / (1.0 + jnp.exp(-e)))                      # SiLU
    g = 1.0 / (1.0 + jnp.exp(-(e @ w2.astype(jnp.float32).T)))  # Sigmoid
    return (xf * g[:, :, None, None]).astype(x.dtype)


if __name__ == "__main__":
    N, C, H, W = 2, 4, 16, 16
    ratio = 2
    Cr = C // ratio

    k0, k1, k2 = jax.random.split(jax.random.PRNGKey(0), 3)
    x = jax.random.normal(k0, (N, C, H, W), jnp.float32)
    w1 = 0.3 * jax.random.normal(k1, (Cr, C), jnp.float32)   # Linear(C -> C//ratio)
    w2 = 0.3 * jax.random.normal(k2, (C, Cr), jnp.float32)   # Linear(C//ratio -> C)

    out = jax.block_until_ready(se_block_forward(x, w1, w2))
    ref = se_block_reference(x, w1, w2)

    assert out.shape == x.shape and out.dtype == x.dtype
    max_err = float(jnp.max(jnp.abs(out - ref)))
    assert max_err < 1e-4, f"mismatch vs reference: {max_err}"
    print("KERNEL_OK")
</pallas_src>

<mosaic_0001>
module attributes {stable_mosaic.version = 11 : i64} {
  func.func @_se_kernel(%arg0: i32, %arg1: memref<1x4x256xf32, #tpu.memory_space<vmem>>, %arg2: memref<2x4xf32, #tpu.memory_space<vmem>>, %arg3: memref<4x2xf32, #tpu.memory_space<vmem>>, %arg4: memref<1x4x256xf32, #tpu.memory_space<vmem>>) attributes {dimension_semantics = [#tpu.dimension_semantics<parallel>], iteration_bounds = array<i64: 2>, scalar_prefetch = 0 : i64, scratch_operands = 0 : i64, tpu.core_type = #tpu.core_type<tc>, window_params = [{transform_indices = @transform_0, window_bounds = array<i64: 1, 4, 256>}, {pipeline_mode = #tpu.pipeline_mode<synchronous>, transform_indices = @transform_1, window_bounds = array<i64: 2, 4>}, {pipeline_mode = #tpu.pipeline_mode<synchronous>, transform_indices = @transform_2, window_bounds = array<i64: 4, 2>}, {transform_indices = @transform_3, window_bounds = array<i64: 1, 4, 256>}]} {
    %c0 = arith.constant 0 : index
    %c0_0 = arith.constant 0 : index
    %c0_1 = arith.constant 0 : index
    %0 = vector.load %arg1[%c0, %c0_0, %c0_1] : memref<1x4x256xf32, #tpu.memory_space<vmem>>, vector<1x4x256xf32>
    %cst = arith.constant dense<0.000000e+00> : vector<1x4xf32>
    %1 = vector.multi_reduction <add>, %0, %cst [2] : vector<1x4x256xf32> to vector<1x4xf32>
    %cst_2 = arith.constant 3.906250e-03 : f32
    %2 = vector.broadcast %cst_2 : f32 to vector<1x4xf32>
    %3 = arith.mulf %1, %2 : vector<1x4xf32>
    %c0_3 = arith.constant 0 : index
    %c0_4 = arith.constant 0 : index
    %4 = vector.load %arg2[%c0_3, %c0_4] : memref<2x4xf32, #tpu.memory_space<vmem>>, vector<2x4xf32>
    %c0_5 = arith.constant 0 : index
    %c0_6 = arith.constant 0 : index
    %5 = vector.load %arg3[%c0_5, %c0_6] : memref<4x2xf32, #tpu.memory_space<vmem>>, vector<4x2xf32>
    %cst_7 = arith.constant dense<0.000000e+00> : vector<1x2xf32>
    %6 = tpu.matmul %3, %4, %cst_7 {dimension_numbers = #tpu.dot_dimension_numbers<[1], [1], [0], [0], [0, 0, 1, 0], [], []>} : vector<1x4xf32>, vector<2x4xf32>, vector<1x2xf32> -> vector<1x2xf32>
    %cst_8 = arith.constant 0.000000e+00 : f32
    %7 = vector.broadcast %cst_8 : f32 to vector<1x2xf32>
    %8 = arith.subf %7, %6 : vector<1x2xf32>
    %9 = math.exp %8 : vector<1x2xf32>
    %cst_9 = arith.constant 1.000000e+00 : f32
    %10 = vector.broadcast %cst_9 : f32 to vector<1x2xf32>
    %11 = arith.addf %10, %9 : vector<1x2xf32>
    %cst_10 = arith.constant 1.000000e+00 : f32
    %12 = vector.broadcast %cst_10 : f32 to vector<1x2xf32>
    %13 = arith.divf %12, %11 : vector<1x2xf32>
    %14 = arith.mulf %6, %13 : vector<1x2xf32>
    %cst_11 = arith.constant dense<0.000000e+00> : vector<1x4xf32>
    %15 = tpu.matmul %14, %5, %cst_11 {dimension_numbers = #tpu.dot_dimension_numbers<[1], [1], [0], [0], [0, 0, 1, 0], [], []>} : vector<1x2xf32>, vector<4x2xf32>, vector<1x4xf32> -> vector<1x4xf32>
    %cst_12 = arith.constant 0.000000e+00 : f32
    %16 = vector.broadcast %cst_12 : f32 to vector<1x4xf32>
    %17 = arith.subf %16, %15 : vector<1x4xf32>
    %18 = math.exp %17 : vector<1x4xf32>
    %cst_13 = arith.constant 1.000000e+00 : f32
    %19 = vector.broadcast %cst_13 : f32 to vector<1x4xf32>
    %20 = arith.addf %19, %18 : vector<1x4xf32>
    %cst_14 = arith.constant 1.000000e+00 : f32
    %21 = vector.broadcast %cst_14 : f32 to vector<1x4xf32>
    %22 = arith.divf %21, %20 : vector<1x4xf32>
    %c0_15 = arith.constant 0 : index
    %c0_16 = arith.constant 0 : index
    %c0_17 = arith.constant 0 : index
    %23 = vector.load %arg1[%c0_15, %c0_16, %c0_17] : memref<1x4x256xf32, #tpu.memory_space<vmem>>, vector<1x4x256xf32>
    %24 = vector.shape_cast %22 : vector<1x4xf32> to vector<1x4x1xf32>
    %25 = vector.broadcast %24 : vector<1x4x1xf32> to vector<1x4x256xf32>
    %26 = arith.mulf %23, %25 : vector<1x4x256xf32>
    %c0_18 = arith.constant 0 : index
    %c0_19 = arith.constant 0 : index
    %c0_20 = arith.constant 0 : index
    %27 = vector.load %arg4[%c0_18, %c0_19, %c0_20] : memref<1x4x256xf32, #tpu.memory_space<vmem>>, vector<1x4x256xf32>
    tpu.vector_store %arg4[%c0_18, %c0_19, %c0_20], %26 {strides = array<i32>} : memref<1x4x256xf32, #tpu.memory_space<vmem>>, vector<1x4x256xf32>,
    return
  }
  func.func @transform_0(%arg0: i32) -> (i32, i32, i32) {
    %c0_i32 = arith.constant 0 : i32
    %c0_i32_0 = arith.constant 0 : i32
    %c0_i32_1 = arith.constant 0 : i32
    return %arg0, %c0_i32, %c0_i32_0 : i32, i32, i32
  }
  func.func @transform_1(%arg0: i32) -> (i32, i32) {
    %c0_i32 = arith.constant 0 : i32
    %c0_i32_0 = arith.constant 0 : i32
    %c0_i32_1 = arith.constant 0 : i32
    return %c0_i32, %c0_i32_0 : i32, i32
  }
  func.func @transform_2(%arg0: i32) -> (i32, i32) {
    %c0_i32 = arith.constant 0 : i32
    %c0_i32_0 = arith.constant 0 : i32
    %c0_i32_1 = arith.constant 0 : i32
    return %c0_i32, %c0_i32_0 : i32, i32
  }
  func.func @transform_3(%arg0: i32) -> (i32, i32, i32) {
    %c0_i32 = arith.constant 0 : i32
    %c0_i32_0 = arith.constant 0 : i32
    %c0_i32_1 = arith.constant 0 : i32
    return %arg0, %c0_i32, %c0_i32_0 : i32, i32, i32
  }
}

</mosaic_0001>

<llo_original>
// kernel: tpu_custom_call.1
$region0: #{tpu_custom_call.1}
  #allocation0 [shape = 'u32[]', space=smem, size = 0x4, offset = 0x4, fixed_abs, tag = 'smem constant byte address 0x4 - core index']
  #allocation1 [shape = 'u32[144,128]{1,0:T(1,128)}', space=vmem, size = 0x12000, scoped, tag = 'internal scratch']
  %s0 = inlined_call_operand.hbm [shape: f32[2,4,256], index: 0, kind: input, shape index: {}]
  %s1 = inlined_call_operand.vmem [shape: f32[2,4], index: 1, kind: input, shape index: {}]
  %s2 = inlined_call_operand.vmem [shape: f32[4,2], index: 2, kind: input, shape index: {}]
  %s3 = inlined_call_operand.hbm [shape: f32[2,4,256], index: 3, kind: output, shape index: {}]
  %s4 = sld [smem:[#allocation0]]
  $region49: #{tpu_custom_call.1} parent=0
    _
  %s6 = ssub.s32 1, %s4
  %s7 = scalar_select 0, %s6, %s4
  $region1: #{tpu_custom_call.1} parent=0
    #allocation2 [shape = 'u8[8192]{0}', space=vmem, size = 0x2000, scoped, tag = 'input window, operand 0']
    #allocation3 [shape = 's32[2]{0}', space=sflag, size = 0x8, scoped, tag = 'scoped memory for tpu_custom_call.1']
    #allocation4 [shape = 's32[2]{0}', space=sflag, size = 0x8, scoped, tag = 'scoped memory for tpu_custom_call.1']
    #allocation5 [shape = 'u8[8192]{0}', space=vmem, size = 0x2000, scoped, tag = 'output window, operand 0']
    %8 = vsyncpa [#allocation3], 0
    %s9 = scalar_lea.sflag [#allocation3], 1
    %10 = vsyncpa %s9, 0
    %11 = vsyncpa [#allocation4], 0
    %s12 = scalar_lea.sflag [#allocation4], 1
    %13 = vsyncpa %s12, 0
    loop: start=0, step=1, limit=4
    $region2: #{tpu_custom_call.1} parent=1 // loop_pre_header
      _
    $region3: #{tpu_custom_call.1} parent=1 // loop_header
      %s15 = sphi 0, %s19
      %p16 = scmp.ge.s32.totalorder %s15, 4
      %s25 = sphi 0, %s27
      %s28 = sphi 0, %s25
      %s29 = sphi 0, %s28
      %s45 = sphi 0, %s29
      %s49 = sphi 0, %s49
      %s51 = sphi 0, %s49
      %s52 = sphi 0, %s51
      %s66 = sphi 0, %s52
      %s70 = sphi 0, %s70
      %s72 = sphi 0, %s70
      %s73 = sphi 0, %s72
      %s87 = sphi 0, %s73
      %s93 = sphi 0, %s95
      %s96 = sphi 0, %s93
      %s97 = sphi 0, %s96
      %s113 = sphi 0, %s97
    $region4: #{tpu_custom_call.1} parent=1 // loop_header_branch
      %18 = sbr.rel (%p16) target = $region8
    $region5: #{tpu_custom_call.1} parent=1 // loop_body
      %s20 = ssub.s32 %s15, 1
      %s21 = ssub.s32 %s15, 2
      %s22 = sadd.s32 %s15, 1
      %s23 = ssub.s32 %s15, %s22
      %p24 = scmp.eq.s32.totalorder %s23, 0
      %s26 = sadd.s32 %s25, 1
      %s27 = scalar_select %p24, %s25, %s26
      %p30 = pneg %p24
      %p31 = scmp.eq.s32.totalorder %s15, 1
      %p32 = por %p30, %p31
      %p33 = scmp.ne.s32.totalorder %s25, %s28
      %p34 = scmp.eq.s32.totalorder %s15, 0
      %p35 = por %p33, %p34
      %p36 = scmp.ne.s32.totalorder %s25, %s28
      %p37 = scmp.eq.s32.totalorder %s20, 1
      %p38 = por %p36, %p37
      %p39 = scmp.ne.s32.totalorder %s28, %s29
      %p40 = scmp.eq.s32.totalorder %s20, 0
      %p41 = por %p39, %p40
      %p42 = scmp.ne.s32.totalorder %s28, %s29
      %p43 = scmp.eq.s32.totalorder %s21, 1
      %p44 = por %p42, %p43
      %p46 = scmp.ne.s32.totalorder %s29, %s45
      %p47 = scmp.eq.s32.totalorder %s21, 0
      %p48 = por %p46, %p47
      %s50 = sadd.s32 %s49, 1
      %p53 = scmp.eq.s32.totalorder %s15, 1
      %p54 = scmp.ne.s32.totalorder %s49, %s51
      %p55 = scmp.eq.s32.totalorder %s15, 0
      %p56 = por %p54, %p55
      %p57 = scmp.ne.s32.totalorder %s49, %s51
      %p58 = scmp.eq.s32.totalorder %s20, 1
      %p59 = por %p57, %p58
      %p60 = scmp.ne.s32.totalorder %s51, %s52
      %p61 = scmp.eq.s32.totalorder %s20, 0
      %p62 = por %p60, %p61
      %p63 = scmp.ne.s32.totalorder %s51, %s52
      %p64 = scmp.eq.s32.totalorder %s21, 1
      %p65 = por %p63, %p64
      %p67 = scmp.ne.s32.totalorder %s52, %s66
      %p68 = scmp.eq.s32.totalorder %s21, 0
      %p69 = por %p67, %p68
      %s71 = sadd.s32 %s70, 1
      %p74 = scmp.eq.s32.totalorder %s15, 1
      %p75 = scmp.ne.s32.totalorder %s70, %s72
      %p76 = scmp.eq.s32.totalorder %s15, 0
      %p77 = por %p75, %p76
      %p78 = scmp.ne.s32.totalorder %s70, %s72
      %p79 = scmp.eq.s32.totalorder %s20, 1
      %p80 = por %p78, %p79
      %p81 = scmp.ne.s32.totalorder %s72, %s73
      %p82 = scmp.eq.s32.totalorder %s20, 0
      %p83 = por %p81, %p82
      %p84 = scmp.ne.s32.totalorder %s72, %s73
      %p85 = scmp.eq.s32.totalorder %s21, 1
      %p86 = por %p84, %p85
      %p88 = scmp.ne.s32.totalorder %s73, %s87
      %p89 = scmp.eq.s32.totalorder %s21, 0
      %p90 = por %p88, %p89
      %s91 = ssub.s32 %s15, %s22
      %p92 = scmp.eq.s32.totalorder %s91, 0
      %s94 = sadd.s32 %s93, 1
      %s95 = scalar_select %p92, %s93, %s94
      %p98 = pneg %p92
      %p99 = scmp.eq.s32.totalorder %s15, 1
      %p100 = por %p98, %p99
      %p101 = scmp.ne.s32.totalorder %s93, %s96
      %p102 = scmp.eq.s32.totalorder %s15, 0
      %p103 = por %p101, %p102
      %p104 = scmp.ne.s32.totalorder %s93, %s96
      %p105 = scmp.eq.s32.totalorder %s20, 1
      %p106 = por %p104, %p105
      %p107 = scmp.ne.s32.totalorder %s96, %s97
      %p108 = scmp.eq.s32.totalorder %s20, 0
      %p109 = por %p107, %p108
      %p110 = scmp.ne.s32.totalorder %s96, %s97
      %p111 = scmp.eq.s32.totalorder %s21, 1
      %p112 = por %p110, %p111
      %p114 = scmp.ne.s32.totalorder %s97, %s113
      %p115 = scmp.eq.s32.totalorder %s21, 0
      %p116 = por %p114, %p115
      %p117 = scmp.le.s32.totalorder 1, %s15
      %p118 = scmp.lt.s32.totalorder %s15, 3
      %p119 = pnand %p117, %p118
      %p120 = pneg %p119
      // Predicated region
      $region9: #{tpu_custom_call.1} parent=5 // pred_check
        _
      $region10: #{tpu_custom_call.1} parent=5 // pred_check_branch
        %122 = sbr.rel (%p119) target = $region12
      $region11: #{tpu_custom_call.1} parent=5 // pred_region
        %s123 = ssub.s32 %s15, 1
        // Predicated region
        $region13: #{tpu_custom_call.1} parent=11 // pred_check
          %p124 = pneg %p62
        $region14: #{tpu_custom_call.1} parent=11 // pred_check_branch
          %126 = sbr.rel (%p124) target = $region16
        $region15: #{tpu_custom_call.1} parent=11 // pred_region
          _
        $region16: #{tpu_custom_call.1} parent=11 // pred_fallthru
          _
        // Predicated region
        $region17: #{tpu_custom_call.1} parent=11 // pred_check
          %p127 = pneg %p83
        $region18: #{tpu_custom_call.1} parent=11 // pred_check_branch
          %129 = sbr.rel (%p127) target = $region20
        $region19: #{tpu_custom_call.1} parent=11 // pred_region
          _
        $region20: #{tpu_custom_call.1} parent=11 // pred_fallthru
          _
      $region12: #{tpu_custom_call.1} parent=5 // pred_fallthru
        _
      %p130 = scmp.lt.s32.totalorder %s15, 2
      // Predicated region
      $region21: #{tpu_custom_call.1} parent=5 // pred_check
        %p131 = pneg %p130
      $region22: #{tpu_custom_call.1} parent=5 // pred_check_branch
        %133 = sbr.rel (%p131) target = $region24
      $region23: #{tpu_custom_call.1} parent=5 // pred_region
        // Predicated region
        $region25: #{tpu_custom_call.1} parent=23 // pred_check
          %p134 = pneg %p35
        $region26: #{tpu_custom_call.1} parent=23 // pred_check_branch
          %136 = sbr.rel (%p134) target = $region28
        $region27: #{tpu_custom_call.1} parent=23 // pred_region
          %s137 = sand.u32 %s25, 1
          %s138 = scalar_lea.sflag [#allocation3], %s137
          %s139 = sand.u32 %s25, 1
          %s140 = smul.addr %s139, 8
          %s141 = scalar_lea.vmem [#allocation2], %s140
          %s143 = ssub.s32 128, 128
          %144 = vsyncadd %s138, %s143
          %s145 = smul.addr %s15, 2
          %s146 = smul.addr %s145, 64
          %s147 = scalar_lea.hbm %s0, %s146
          %s149 = sshll.u32 %s141, 4
          %s150 = int_to_ptr.vmem [resolvable:$true] %s149
          %152 = dma.hbm_to_vmem [thread:$0]  %s147, 128, %s150, %s138
        $region28: #{tpu_custom_call.1} parent=23 // pred_fallthru
          _
      $region24: #{tpu_custom_call.1} parent=5 // pred_fallthru
        _
      %p153 = scmp.le.s32.totalorder 1, %s15
      %p154 = scmp.lt.s32.totalorder %s15, 3
      %p155 = pnand %p153, %p154
      %p156 = pneg %p155
      // Predicated region
      $region29: #{tpu_custom_call.1} parent=5 // pred_check
        _
      $region30: #{tpu_custom_call.1} parent=5 // pred_check_branch
        %158 = sbr.rel (%p155) target = $region32
      $region31: #{tpu_custom_call.1} parent=5 // pred_region
        %s159 = ssub.s32 %s15, 1
        %s160 = sand.u32 %s28, 1
        %s161 = scalar_lea.sflag [#allocation3], %s160
        %s162 = sand.u32 %s28, 1
        %s163 = smul.addr %s162, 8
        %s164 = scalar_lea.vmem [#allocation2], %s163
        // Predicated region
        $region33: #{tpu_custom_call.1} parent=31 // pred_check
          %p165 = pneg %p41
        $region34: #{tpu_custom_call.1} parent=31 // pred_check_branch
          %167 = sbr.rel (%p165) target = $region36
        $region35: #{tpu_custom_call.1} parent=31 // pred_region
          %168 = dma.done %s161, 128
        $region36: #{tpu_custom_call.1} parent=31 // pred_fallthru
          _
        %s169 = sand.u32 %s28, 1
        %s170 = scalar_lea.sflag [#allocation3], %s169
        %s171 = sand.u32 %s28, 1
        %s172 = smul.addr %s171, 8
        %s173 = scalar_lea.vmem [#allocation2], %s172
        %p174 = pneg %p41
        %p175 = pneg %p38
        %p176 = pneg %p62
        %p177 = pneg %p59
        %p178 = pneg %p83
        %p179 = pneg %p80
        %p180 = pneg %p109
        %p181 = pneg %p106
        %s182 = sand.u32 %s96, 1
        %s183 = scalar_lea.sflag [#allocation4], %s182
        %s184 = sand.u32 %s96, 1
        %s185 = smul.addr %s184, 8
        %s186 = scalar_lea.vmem [#allocation5], %s185
        %v187 = vld [vmem:[%s164] sm:$0xff]
        %v189 = vcombine.high %v187, %v187
        %vm191 = vcmask 1043456
        %v192 = vsel %vm191, %v187, 0.0
        %v193 = vsel %vm191, %v189, 0.0
        %v194 = vadd.f32 %v192, %v193
        %195 = vadd.xlane.f32.xlu0 %v194
        %v196 = vpop.xlane.xlu0 %195
        %v197 = vmul.f32 %v196, 0.00390625
        %v198 = vld [vmem:[%s1] sm:$0x3]
        %v199 = vld [vmem:[%s2] sm:$0xf]
        %v201 = vlaneseq
        %v202 = vand.u32 %v201, 127
        %v203 = vlaneseq
        %v204 = vshrl.u32 %v203, 7
        %v205 = vsub.s32 %v202, %v204
        %v206 = vrot.slane %v197, %v205
        %vm207 = vcmask 31744
        %v208 = vsel %vm207, %v206, 0
        %v211 = vsel %vm207, %v198, 0
        %213 = vmatprep.subr.mxu0 0.0
        %214 = vmatpush1.xpose.msra.mxu0 %v211
        %215 = vmatprep.subr.mxu0 0.0
        %216 = vmatpush1.xpose.msra.mxu0 0.0
        %217 = vmatprep.subr.mxu0 0.0
        %218 = vmatpush1.xpose.msra.mxu0 0.0
        %219 = vmatprep.subr.mxu0 0.0
        %220 = vmatpush1.xpose.msra.mxu0 0.0
        %221 = vmatprep.subr.mxu0 0.0
        %222 = vmatpush1.xpose.msra.mxu0 0.0
        %223 = vmatprep.subr.mxu0 0.0
        %224 = vmatpush1.xpose.msra.mxu0 0.0
        %225 = vmatprep.subr.mxu0 0.0
        %226 = vmatpush1.xpose.msra.mxu0 0.0
        %227 = vmatprep.subr.mxu0 0.0
        %228 = vmatpush1.xpose.msra.mxu0 0.0
        %229 = vmatprep.subr.mxu0 0.0
        %230 = vmatpush1.xpose.msra.mxu0 0.0
        %231 = vmatprep.subr.mxu0 0.0
        %232 = vmatpush1.xpose.msra.mxu0 0.0
        %233 = vmatprep.subr.mxu0 0.0
        %234 = vmatpush1.xpose.msra.mxu0 0.0
        %235 = vmatprep.subr.mxu0 0.0
        %236 = vmatpush1.xpose.msra.mxu0 0.0
        %237 = vmatprep.subr.mxu0 0.0
        %238 = vmatpush1.xpose.msra.mxu0 0.0
        %239 = vmatprep.subr.mxu0 0.0
        %240 = vmatpush1.xpose.msra.mxu0 0.0
        %241 = vmatprep.subr.mxu0 0.0
        %242 = vmatpush1.xpose.msra.mxu0 0.0
        %243 = vmatprep.subr.mxu0 0.0
        %244 = vmatpush1.xpose.msra.mxu0 0.0
        %245 = vmatprep.subr.mxu0 0.0
        %246 = vmatpush1.xpose.msra.mxu0 0.0
        %247 = vmatprep.subr.mxu0 0.0
        %248 = vmatpush1.xpose.msra.mxu0 0.0
        %249 = vmatprep.subr.mxu0 0.0
        %250 = vmatpush1.xpose.msra.mxu0 0.0
        %251 = vmatprep.subr.mxu0 0.0
        %252 = vmatpush1.xpose.msra.mxu0 0.0
        %253 = vmatprep.subr.mxu0 0.0
        %254 = vmatpush1.xpose.msra.mxu0 0.0
        %255 = vmatprep.subr.mxu0 0.0
        %256 = vmatpush1.xpose.msra.mxu0 0.0
        %257 = vmatprep.subr.mxu0 0.0
        %258 = vmatpush1.xpose.msra.mxu0 0.0
        %259 = vmatprep.subr.mxu0 0.0
        %260 = vmatpush1.xpose.msra.mxu0 0.0
        %261 = vmatprep.subr.mxu0 0.0
        %262 = vmatpush1.xpose.msra.mxu0 0.0
        %263 = vmatprep.subr.mxu0 0.0
        %264 = vmatpush1.xpose.msra.mxu0 0.0
        %265 = vmatprep.subr.mxu0 0.0
        %266 = vmatpush1.xpose.msra.mxu0 0.0
        %267 = vmatprep.subr.mxu0 0.0
        %268 = vmatpush1.xpose.msra.mxu0 0.0
        %269 = vmatprep.subr.mxu0 0.0
        %270 = vmatpush1.xpose.msra.mxu0 0.0
        %271 = vmatprep.subr.mxu0 0.0
        %272 = vmatpush1.xpose.msra.mxu0 0.0
        %273 = vmatprep.subr.mxu0 0.0
        %274 = vmatpush1.xpose.msra.mxu0 0.0
        %275 = vmatprep.subr.mxu0 0.0
        %276 = vmatpush1.xpose.msra.mxu0 0.0
        %277 = vmatprep.mubr.f32.mxu0 0.0
        %278 = vmatmul.mubr.f32.gmra.mrb[0].mxu0 %v208
        %v279 = vpop.f32.mrb[0].mxu0
        %v280 = vadd.f32 0.0, %v279
        %v281 = vpop.f32.mrb[0].mxu0
        %282 = vdwg.mxu0
        %v283 = vsub.f32 0.0, %v280
        %v284 = vmul.f32 %v283, 1.442695
        %v285 = vpow.pop %v284
        %v286 = vadd.f32 %v285, 1.0
        %v287 = vrcp.pop %v286
        %v288 = vmul.f32 1.0, %v287
        %v289 = vmul.f32 %v280, %v288
        %vm290 = vcmask 15360
        %v292 = vsel %vm290, %v289, 0
        %v295 = vsel %vm290, %v199, 0
        %297 = vmatprep.subr.mxu0 0.0
        %298 = vmatpush1.xpose.msra.mxu0 %v295
        %299 = vmatprep.subr.mxu0 0.0
        %300 = vmatpush1.xpose.msra.mxu0 0.0
        %301 = vmatprep.subr.mxu0 0.0
        %302 = vmatpush1.xpose.msra.mxu0 0.0
        %303 = vmatprep.subr.mxu0 0.0
        %304 = vmatpush1.xpose.msra.mxu0 0.0
        %305 = vmatprep.subr.mxu0 0.0
        %306 = vmatpush1.xpose.msra.mxu0 0.0
        %307 = vmatprep.subr.mxu0 0.0
        %308 = vmatpush1.xpose.msra.mxu0 0.0
        %309 = vmatprep.subr.mxu0 0.0
        %310 = vmatpush1.xpose.msra.mxu0 0.0
        %311 = vmatprep.subr.mxu0 0.0
        %312 = vmatpush1.xpose.msra.mxu0 0.0
        %313 = vmatprep.subr.mxu0 0.0
        %314 = vmatpush1.xpose.msra.mxu0 0.0
        %315 = vmatprep.subr.mxu0 0.0
        %316 = vmatpush1.xpose.msra.mxu0 0.0
        %317 = vmatprep.subr.mxu0 0.0
        %318 = vmatpush1.xpose.msra.mxu0 0.0
        %319 = vmatprep.subr.mxu0 0.0
        %320 = vmatpush1.xpose.msra.mxu0 0.0
        %321 = vmatprep.subr.mxu0 0.0
        %322 = vmatpush1.xpose.msra.mxu0 0.0
        %323 = vmatprep.subr.mxu0 0.0
        %324 = vmatpush1.xpose.msra.mxu0 0.0
        %325 = vmatprep.subr.mxu0 0.0
        %326 = vmatpush1.xpose.msra.mxu0 0.0
        %327 = vmatprep.subr.mxu0 0.0
        %328 = vmatpush1.xpose.msra.mxu0 0.0
        %329 = vmatprep.subr.mxu0 0.0
        %330 = vmatpush1.xpose.msra.mxu0 0.0
        %331 = vmatprep.subr.mxu0 0.0
        %332 = vmatpush1.xpose.msra.mxu0 0.0
        %333 = vmatprep.subr.mxu0 0.0
        %334 = vmatpush1.xpose.msra.mxu0 0.0
        %335 = vmatprep.subr.mxu0 0.0
        %336 = vmatpush1.xpose.msra.mxu0 0.0
        %337 = vmatprep.subr.mxu0 0.0
        %338 = vmatpush1.xpose.msra.mxu0 0.0
        %339 = vmatprep.subr.mxu0 0.0
        %340 = vmatpush1.xpose.msra.mxu0 0.0
        %341 = vmatprep.subr.mxu0 0.0
        %342 = vmatpush1.xpose.msra.mxu0 0.0
        %343 = vmatprep.subr.mxu0 0.0
        %344 = vmatpush1.xpose.msra.mxu0 0.0
        %345 = vmatprep.subr.mxu0 0.0
        %346 = vmatpush1.xpose.msra.mxu0 0.0
        %347 = vmatprep.subr.mxu0 0.0
        %348 = vmatpush1.xpose.msra.mxu0 0.0
        %349 = vmatprep.subr.mxu0 0.0
        %350 = vmatpush1.xpose.msra.mxu0 0.0
        %351 = vmatprep.subr.mxu0 0.0
        %352 = vmatpush1.xpose.msra.mxu0 0.0
        %353 = vmatprep.subr.mxu0 0.0
        %354 = vmatpush1.xpose.msra.mxu0 0.0
        %355 = vmatprep.subr.mxu0 0.0
        %356 = vmatpush1.xpose.msra.mxu0 0.0
        %357 = vmatprep.subr.mxu0 0.0
        %358 = vmatpush1.xpose.msra.mxu0 0.0
        %359 = vmatprep.subr.mxu0 0.0
        %360 = vmatpush1.xpose.msra.mxu0 0.0
        %361 = vmatprep.mubr.f32.mxu0 0.0
        %362 = vmatmul.mubr.f32.gmra.mrb[0].mxu0 %v292
        %v363 = vpop.f32.mrb[0].mxu0
        %v364 = vadd.f32 0.0, %v363
        %v365 = vpop.f32.mrb[0].mxu0
        %366 = vdwg.mxu0
        %v367 = vsub.f32 0.0, %v364
        %v368 = vmul.f32 %v367, 1.442695
        %v369 = vpow.pop %v368
        %v370 = vadd.f32 %v369, 1.0
        %v371 = vrcp.pop %v370
        %v372 = vmul.f32 1.0, %v371
        %v373 = vlaneseq
        %v374 = vshrl.u32 %v373, 7
        %v375 = vsub.s32 0, %v374
        %v376 = vrot.slane %v372, %v375
        %378 = vbcast.lane.b32.xlu0 %v376, 256
        %v379 = vpop.permute.xlu0 %378
        %v382 = vunpack.c.l.s4 839922192
        %v383 = vunpack.c.0.s8 %v382
        %v384 = vlaneseq
        %v385 = vshrl.u32 %v384, 7
        %v386 = vsub.s32 %v383, %v385
        %v387 = vrot.slane %v379, %v386
        %v389 = vmul.f32 %v187, %v387
        %390 = vst [vmem:[%s186] sm:$0xff] %v389
        %s391 = sand.u32 %s96, 1
        %s392 = scalar_lea.sflag [#allocation4], %s391
        %s393 = sand.u32 %s96, 1
        %s394 = smul.addr %s393, 8
        %s395 = scalar_lea.vmem [#allocation5], %s394
        // Predicated region
        $region37: #{tpu_custom_call.1} parent=31 // pred_check
          %p396 = pneg %p106
        $region38: #{tpu_custom_call.1} parent=31 // pred_check_branch
          %398 = sbr.rel (%p396) target = $region40
        $region39: #{tpu_custom_call.1} parent=31 // pred_region
          %s400 = ssub.s32 128, 128
          %401 = vsyncadd %s392, %s400
          %s402 = smul.addr %s20, 2
          %s403 = smul.addr %s402, 64
          %s404 = scalar_lea.hbm %s3, %s403
          %s406 = sshll.u32 %s395, 4
          %s407 = int_to_ptr.vmem [resolvable:$true] %s406
          %409 = dma.vmem_to_hbm [thread:$0]  %s407, 128, %s404, %s392
        $region40: #{tpu_custom_call.1} parent=31 // pred_fallthru
          _
      $region32: #{tpu_custom_call.1} parent=5 // pred_fallthru
        _
      %p410 = scmp.le.s32.totalorder 2, %s15
      // Predicated region
      $region41: #{tpu_custom_call.1} parent=5 // pred_check
        %p411 = pneg %p410
      $region42: #{tpu_custom_call.1} parent=5 // pred_check_branch
        %413 = sbr.rel (%p411) target = $region44
      $region43: #{tpu_custom_call.1} parent=5 // pred_region
        %s414 = ssub.s32 %s15, 2
        // Predicated region
        $region45: #{tpu_custom_call.1} parent=43 // pred_check
          %p415 = pneg %p112
        $region46: #{tpu_custom_call.1} parent=43 // pred_check_branch
          %417 = sbr.rel (%p415) target = $region48
        $region47: #{tpu_custom_call.1} parent=43 // pred_region
          %s418 = sand.u32 %s97, 1
          %s419 = scalar_lea.sflag [#allocation4], %s418
          %s420 = sand.u32 %s97, 1
          %s421 = smul.addr %s420, 8
          %s422 = scalar_lea.vmem [#allocation5], %s421
          %423 = dma.done %s419, 128
        $region48: #{tpu_custom_call.1} parent=43 // pred_fallthru
          _
      $region44: #{tpu_custom_call.1} parent=5 // pred_fallthru
        _
    $region6: #{tpu_custom_call.1} parent=1 // loop_footer
      %s19 = sadd.s32 1, %s15
    $region7: #{tpu_custom_call.1} parent=1 // loop_footer_branch
      %14 = sbr.rel target = $region3
    $region8: #{tpu_custom_call.1} parent=1 // loop_exit
      _
    %424 = vsyncpa [#allocation3], 1
    %s425 = scalar_lea.sflag [#allocation3], 1
    %426 = vsyncpa %s425, 1
    %427 = vsyncpa [#allocation4], 1
    %s428 = scalar_lea.sflag [#allocation4], 1
    %429 = vsyncpa %s428, 1

</llo_original>
